<compile_context>
chip_gen: v5e
topology: v5e:2x2
jax: 0.10.0
libtpu: 0.0.40
codegen_flags: <defaults>
</compile_context>

<pallas_src>
import functools
import math

import jax
import jax.numpy as jnp
from jax import lax
from jax.experimental import pallas as pl
from jax.experimental.pallas import tpu as pltpu


def _round_up(x, m):
    return (x + m - 1) // m * m


# ----------------------------------------------------------------------------
# Linear: y = x @ w + b  [+ relu] [+ residual]
# ----------------------------------------------------------------------------
def _linear_kernel(*refs, activation, has_residual):
    if has_residual:
        x_ref, w_ref, b_ref, r_ref, o_ref, acc_ref = refs
    else:
        x_ref, w_ref, b_ref, o_ref, acc_ref = refs
        r_ref = None

    k = pl.program_id(2)

    @pl.when(k == 0)
    def _():
        acc_ref[...] = jnp.zeros_like(acc_ref)

    acc_ref[...] += jnp.dot(x_ref[...], w_ref[...],
                            preferred_element_type=jnp.float32)

    @pl.when(k == pl.num_programs(2) - 1)
    def _():
        out = acc_ref[...] + b_ref[...]          # (tm, tn) + (1, tn)
        if activation == "relu":
            out = jnp.maximum(out, 0.0)
        if r_ref is not None:
            out = out + r_ref[...].astype(jnp.float32)
        o_ref[...] = out.astype(o_ref.dtype)


def linear(x, w, b, *, residual=None, activation=None, tm=128, tn=256, tk=512):
    """x: (M, K), w: (K, N) (already transposed from torch's (N, K)), b: (N,)."""
    M, K = x.shape
    K2, N = w.shape
    assert K == K2

    Mp = _round_up(M, 8)
    Np = _round_up(N, 128)
    Kp = _round_up(K, 128)
    tm = min(tm, Mp)
    tn = min(tn, Np)
    tk = min(tk, Kp)
    Mp = _round_up(Mp, tm)
    Np = _round_up(Np, tn)
    Kp = _round_up(Kp, tk)

    xp = jnp.zeros((Mp, Kp), x.dtype).at[:M, :K].set(x)
    wp = jnp.zeros((Kp, Np), w.dtype).at[:K, :N].set(w)
    bp = jnp.zeros((1, Np), b.dtype).at[0, :N].set(b)

    args = [xp, wp, bp]
    in_specs = [
        pl.BlockSpec((tm, tk), lambda i, j, k: (i, k)),
        pl.BlockSpec((tk, tn), lambda i, j, k: (k, j)),
        pl.BlockSpec((1, tn), lambda i, j, k: (0, j)),
    ]
    if residual is not None:
        rp = jnp.zeros((Mp, Np), residual.dtype).at[:M, :N].set(residual)
        args.append(rp)
        in_specs.append(pl.BlockSpec((tm, tn), lambda i, j, k: (i, j)))

    kernel = functools.partial(_linear_kernel, activation=activation,
                               has_residual=residual is not None)

    out = pl.pallas_call(
        kernel,
        out_shape=jax.ShapeDtypeStruct((Mp, Np), x.dtype),
        grid_spec=pltpu.PrefetchScalarGridSpec(
            num_scalar_prefetch=0,
            grid=(Mp // tm, Np // tn, Kp // tk),
            in_specs=in_specs,
            out_specs=pl.BlockSpec((tm, tn), lambda i, j, k: (i, j)),
            scratch_shapes=[pltpu.VMEM((tm, tn), jnp.float32)],
        ),
        compiler_params=pltpu.CompilerParams(
            dimension_semantics=("parallel", "parallel", "arbitrary")),
    )(*args)
    return out[:M, :N]


# ----------------------------------------------------------------------------
# LayerNorm over last dim (torch nn.LayerNorm, eps=1e-5, biased variance)
# ----------------------------------------------------------------------------
def _layernorm_kernel(x_ref, g_ref, b_ref, o_ref, *, eps):
    x = x_ref[...].astype(jnp.float32)
    mean = jnp.mean(x, axis=-1, keepdims=True)
    xc = x - mean
    var = jnp.mean(xc * xc, axis=-1, keepdims=True)
    inv = lax.rsqrt(var + eps)
    o_ref[...] = (xc * inv * g_ref[...] + b_ref[...]).astype(o_ref.dtype)


def layer_norm(x, gamma, beta, *, eps=1e-5, tm=256):
    M, D = x.shape
    Mp = _round_up(M, 8)
    tm = min(tm, Mp)
    Mp = _round_up(Mp, tm)
    xp = jnp.zeros((Mp, D), x.dtype).at[:M].set(x)
    g = gamma.reshape(1, D)
    b = beta.reshape(1, D)

    out = pl.pallas_call(
        functools.partial(_layernorm_kernel, eps=eps),
        out_shape=jax.ShapeDtypeStruct((Mp, D), x.dtype),
        grid_spec=pltpu.PrefetchScalarGridSpec(
            num_scalar_prefetch=0,
            grid=(Mp // tm,),
            in_specs=[
                pl.BlockSpec((tm, D), lambda i: (i, 0)),
                pl.BlockSpec((1, D), lambda i: (0, 0)),
                pl.BlockSpec((1, D), lambda i: (0, 0)),
            ],
            out_specs=pl.BlockSpec((tm, D), lambda i: (i, 0)),
        ),
        compiler_params=pltpu.CompilerParams(
            dimension_semantics=("parallel",)),
    )(xp, g, b)
    return out[:M]


# ----------------------------------------------------------------------------
# Scaled dot-product attention core (per batch x head), mask applied in-kernel.
# ----------------------------------------------------------------------------
def _attn_kernel(q_ref, k_ref, v_ref, m_ref, o_ref, *, scale):
    q = q_ref[0, 0].astype(jnp.float32)           # (T, hd)
    k = k_ref[0, 0].astype(jnp.float32)           # (S, hd)
    v = v_ref[0, 0].astype(jnp.float32)           # (S, hd)
    mask = m_ref[0]                               # (T, S)

    logits = jnp.dot(q, k.T, preferred_element_type=jnp.float32) * scale
    # torch: logits.masked_fill(mask == 0, -1000.0)  (applied AFTER scaling)
    logits = jnp.where(mask == 0, -1000.0, logits)

    m_max = jnp.max(logits, axis=-1, keepdims=True)
    unnorm = jnp.exp(logits - m_max)
    denom = jnp.sum(unnorm, axis=-1, keepdims=True)
    weights = unnorm * pl.reciprocal(denom, approx=False)
    o_ref[0, 0] = jnp.dot(weights, v,
                          preferred_element_type=jnp.float32).astype(o_ref.dtype)


def _attention_core(q, k, v, mask):
    B, H, T, hd = q.shape
    S = k.shape[2]
    if mask is None:
        mask = jnp.ones((1, T, S), dtype=jnp.float32)
    if mask.ndim == 2:
        mask = mask[None]
    mask = mask.astype(jnp.float32)
    mask_batched = mask.shape[0] > 1
    mask_map = (lambda b, h: (b, 0, 0)) if mask_batched else (lambda b, h: (0, 0, 0))
    scale = 1.0 / math.sqrt(hd)

    return pl.pallas_call(
        functools.partial(_attn_kernel, scale=scale),
        out_shape=jax.ShapeDtypeStruct((B, H, T, hd), q.dtype),
        grid_spec=pltpu.PrefetchScalarGridSpec(
            num_scalar_prefetch=0,
            grid=(B, H),
            in_specs=[
                pl.BlockSpec((1, 1, T, hd), lambda b, h: (b, h, 0, 0)),
                pl.BlockSpec((1, 1, S, hd), lambda b, h: (b, h, 0, 0)),
                pl.BlockSpec((1, 1, S, hd), lambda b, h: (b, h, 0, 0)),
                pl.BlockSpec((1, T, S), mask_map),
            ],
            out_specs=pl.BlockSpec((1, 1, T, hd), lambda b, h: (b, h, 0, 0)),
        ),
        compiler_params=pltpu.CompilerParams(
            dimension_semantics=("parallel", "parallel")),
    )(q, k, v, mask)


# ----------------------------------------------------------------------------
# MultiHeadAttention (scaling=True), residual fused into the output projection.
# ----------------------------------------------------------------------------
def multi_head_attention(query, keys, values, mask, p, num_head, residual=None):
    B, T, D = query.shape
    S = keys.shape[1]
    hidden = p["wq"].shape[1]
    hd = hidden // num_head

    q = linear(query.reshape(B * T, D), p["wq"], p["bq"])
    k = linear(keys.reshape(B * S, keys.shape[-1]), p["wk"], p["bk"])
    v = linear(values.reshape(B * S, values.shape[-1]), p["wv"], p["bv"])

    q = q.reshape(B, T, num_head, hd).transpose(0, 2, 1, 3)
    k = k.reshape(B, S, num_head, hd).transpose(0, 2, 1, 3)
    v = v.reshape(B, S, num_head, hd).transpose(0, 2, 1, 3)

    ctx = _attention_core(q, k, v, mask)                  # (B, H, T, hd)
    ctx = ctx.transpose(0, 2, 1, 3).reshape(B * T, hidden)

    res = None if residual is None else residual.reshape(B * T, D)
    out = linear(ctx, p["wo"], p["bo"], residual=res)
    return out.reshape(B, T, D)


# ----------------------------------------------------------------------------
# Full TransformerDecoderLayer forward (eval mode: dropout = identity)
# ----------------------------------------------------------------------------
def transformer_decoder_layer(encoder_states, decoder_states, params,
                              src_mask=None, tgt_mask=None, num_head=4):
    B, T, D = decoder_states.shape

    # Self-attention block
    y1n = layer_norm(decoder_states.reshape(B * T, D),
                     params["ln1_g"], params["ln1_b"]).reshape(B, T, D)
    y1 = multi_head_attention(y1n, y1n, y1n, tgt_mask, params["attn"],
                              num_head, residual=decoder_states)

    # Cross-attention block (torch forward reuses self.attention's weights here)
    y2n = layer_norm(y1.reshape(B * T, D),
                     params["ln2_g"], params["ln2_b"]).reshape(B, T, D)
    y2 = multi_head_attention(y2n, encoder_states, encoder_states, src_mask,
                              params["attn"], num_head, residual=y1)

    # Feed-forward block
    y3n = layer_norm(y2.reshape(B * T, D), params["ln3_g"], params["ln3_b"])
    h = linear(y3n, params["ff_w1"], params["ff_b1"], activation="relu")
    y3 = linear(h, params["ff_w2"], params["ff_b2"],
                residual=y2.reshape(B * T, D))
    return y3.reshape(B, T, D)


# ----------------------------------------------------------------------------
# Pure-JAX reference (for correctness check)
# ----------------------------------------------------------------------------
def _mm(a, b):
    return jnp.dot(a, b, precision=lax.Precision.HIGHEST)


def _ref_ln(x, g, b, eps=1e-5):
    mu = x.mean(-1, keepdims=True)
    var = ((x - mu) ** 2).mean(-1, keepdims=True)
    return (x - mu) / jnp.sqrt(var + eps) * g + b


def _ref_mha(q_in, k_in, v_in, mask, p, num_head):
    B, T, D = q_in.shape
    S = k_in.shape[1]
    hd = p["wq"].shape[1] // num_head
    q = _mm(q_in, p["wq"]) + p["bq"]
    k = _mm(k_in, p["wk"]) + p["bk"]
    v = _mm(v_in, p["wv"]) + p["bv"]
    q = q.reshape(B, T, num_head, hd).transpose(0, 2, 1, 3)
    k = k.reshape(B, S, num_head, hd).transpose(0, 2, 1, 3)
    v = v.reshape(B, S, num_head, hd).transpose(0, 2, 1, 3)
    logits = jnp.einsum("bhtd,bhsd->bhts", q, k,
                        precision=lax.Precision.HIGHEST) / math.sqrt(hd)
    if mask is not None:
        m = mask if mask.ndim == 3 else mask[None]
        logits = jnp.where(m[:, None, :, :] == 0, -1000.0, logits)
    w = jax.nn.softmax(logits, axis=-1)
    ctx = jnp.einsum("bhts,bhsd->bhtd", w, v, precision=lax.Precision.HIGHEST)
    ctx = ctx.transpose(0, 2, 1, 3).reshape(B, T, num_head * hd)
    return _mm(ctx, p["wo"]) + p["bo"]


def _ref_decoder_layer(enc, dec, params, src_mask, tgt_mask, num_head):
    y1n = _ref_ln(dec, params["ln1_g"], params["ln1_b"])
    y1 = _ref_mha(y1n, y1n, y1n, tgt_mask, params["attn"], num_head) + dec
    y2n = _ref_ln(y1, params["ln2_g"], params["ln2_b"])
    y2 = _ref_mha(y2n, enc, enc, src_mask, params["attn"], num_head) + y1
    y3n = _ref_ln(y2, params["ln3_g"], params["ln3_b"])
    h = jax.nn.relu(_mm(y3n, params["ff_w1"]) + params["ff_b1"])
    return _mm(h, params["ff_w2"]) + params["ff_b2"] + y2


if __name__ == "__main__":
    key = jax.random.PRNGKey(0)
    B, T_src, T_tgt, D, H = 2, 8, 8, 32, 4
    FF = 4 * D

    ks = iter(jax.random.split(key, 32))

    def nrm(shape, scale=0.1):
        return jax.random.normal(next(ks), shape, dtype=jnp.float32) * scale

    params = {
        "attn": {
            "wq": nrm((D, D)), "bq": nrm((D,)),
            "wk": nrm((D, D)), "bk": nrm((D,)),
            "wv": nrm((D, D)), "bv": nrm((D,)),
            "wo": nrm((D, D)), "bo": nrm((D,)),
        },
        "ln1_g": jnp.ones((D,), jnp.float32) + nrm((D,)), "ln1_b": nrm((D,)),
        "ln2_g": jnp.ones((D,), jnp.float32) + nrm((D,)), "ln2_b": nrm((D,)),
        "ln3_g": jnp.ones((D,), jnp.float32) + nrm((D,)), "ln3_b": nrm((D,)),
        "ff_w1": nrm((D, FF)), "ff_b1": nrm((FF,)),
        "ff_w2": nrm((FF, D)), "ff_b2": nrm((D,)),
    }

    enc = jax.random.normal(next(ks), (B, T_src, D), dtype=jnp.float32)
    dec = jax.random.normal(next(ks), (B, T_tgt, D), dtype=jnp.float32)
    tgt_mask = jnp.tril(jnp.ones((T_tgt, T_tgt), dtype=jnp.float32))[None]  # (1, T, T)
    src_mask = None

    out = transformer_decoder_layer(enc, dec, params,
                                    src_mask=src_mask, tgt_mask=tgt_mask,
                                    num_head=H)
    out = jax.block_until_ready(out)

    ref = _ref_decoder_layer(enc, dec, params, src_mask, tgt_mask, H)

    assert out.shape == (B, T_tgt, D), out.shape
    assert bool(jnp.all(jnp.isfinite(out)))
    max_err = float(jnp.max(jnp.abs(out - ref)))
    assert max_err < 1e-2, f"max abs error vs reference: {max_err}"

    print("KERNEL_OK")
</pallas_src>

<mosaic_0001>
module attributes {stable_mosaic.version = 11 : i64} {
  func.func @_layernorm_kernel(%arg0: i32, %arg1: memref<16x32xf32, #tpu.memory_space<vmem>>, %arg2: memref<1x32xf32, #tpu.memory_space<vmem>>, %arg3: memref<1x32xf32, #tpu.memory_space<vmem>>, %arg4: memref<16x32xf32, #tpu.memory_space<vmem>>) attributes {dimension_semantics = [#tpu.dimension_semantics<parallel>], iteration_bounds = array<i64: 1>, scalar_prefetch = 0 : i64, scratch_operands = 0 : i64, tpu.core_type = #tpu.core_type<tc>, window_params = [{transform_indices = @transform_0, window_bounds = array<i64: 16, 32>}, {pipeline_mode = #tpu.pipeline_mode<synchronous>, transform_indices = @transform_1, window_bounds = array<i64: 1, 32>}, {pipeline_mode = #tpu.pipeline_mode<synchronous>, transform_indices = @transform_2, window_bounds = array<i64: 1, 32>}, {transform_indices = @transform_3, window_bounds = array<i64: 16, 32>}]} {
    %c0 = arith.constant 0 : index
    %c0_0 = arith.constant 0 : index
    %0 = vector.load %arg1[%c0, %c0_0] : memref<16x32xf32, #tpu.memory_space<vmem>>, vector<16x32xf32>
    %cst = arith.constant dense<0.000000e+00> : vector<16xf32>
    %1 = vector.multi_reduction <add>, %0, %cst [1] : vector<16x32xf32> to vector<16xf32>
    %2 = vector.shape_cast %1 : vector<16xf32> to vector<16x1xf32>
    %cst_1 = arith.constant 3.200000e+01 : f32
    %3 = vector.broadcast %cst_1 : f32 to vector<16x1xf32>
    %4 = arith.divf %2, %3 : vector<16x1xf32>
    %5 = vector.broadcast %4 : vector<16x1xf32> to vector<16x32xf32>
    %6 = arith.subf %0, %5 : vector<16x32xf32>
    %7 = arith.mulf %6, %6 : vector<16x32xf32>
    %cst_2 = arith.constant dense<0.000000e+00> : vector<16xf32>
    %8 = vector.multi_reduction <add>, %7, %cst_2 [1] : vector<16x32xf32> to vector<16xf32>
    %9 = vector.shape_cast %8 : vector<16xf32> to vector<16x1xf32>
    %cst_3 = arith.constant 3.200000e+01 : f32
    %10 = vector.broadcast %cst_3 : f32 to vector<16x1xf32>
    %11 = arith.divf %9, %10 : vector<16x1xf32>
    %cst_4 = arith.constant 9.99999974E-6 : f32
    %12 = vector.broadcast %cst_4 : f32 to vector<16x1xf32>
    %13 = arith.addf %11, %12 : vector<16x1xf32>
    %14 = math.rsqrt %13 : vector<16x1xf32>
    %15 = vector.broadcast %14 : vector<16x1xf32> to vector<16x32xf32>
    %16 = arith.mulf %6, %15 : vector<16x32xf32>
    %c0_5 = arith.constant 0 : index
    %c0_6 = arith.constant 0 : index
    %17 = vector.load %arg2[%c0_5, %c0_6] : memref<1x32xf32, #tpu.memory_space<vmem>>, vector<1x32xf32>
    %18 = vector.broadcast %17 : vector<1x32xf32> to vector<16x32xf32>
    %19 = arith.mulf %16, %18 : vector<16x32xf32>
    %c0_7 = arith.constant 0 : index
    %c0_8 = arith.constant 0 : index
    %20 = vector.load %arg3[%c0_7, %c0_8] : memref<1x32xf32, #tpu.memory_space<vmem>>, vector<1x32xf32>
    %21 = vector.broadcast %20 : vector<1x32xf32> to vector<16x32xf32>
    %22 = arith.addf %19, %21 : vector<16x32xf32>
    %c0_9 = arith.constant 0 : index
    %c0_10 = arith.constant 0 : index
    %23 = vector.load %arg4[%c0_9, %c0_10] : memref<16x32xf32, #tpu.memory_space<vmem>>, vector<16x32xf32>
    tpu.vector_store %arg4[%c0_9, %c0_10], %22 {strides = array<i32>} : memref<16x32xf32, #tpu.memory_space<vmem>>, vector<16x32xf32>,
    return
  }
  func.func @transform_0(%arg0: i32) -> (i32, i32) {
    %c0_i32 = arith.constant 0 : i32
    %c0_i32_0 = arith.constant 0 : i32
    return %arg0, %c0_i32 : i32, i32
  }
  func.func @transform_1(%arg0: i32) -> (i32, i32) {
    %c0_i32 = arith.constant 0 : i32
    %c0_i32_0 = arith.constant 0 : i32
    %c0_i32_1 = arith.constant 0 : i32
    return %c0_i32, %c0_i32_0 : i32, i32
  }
  func.func @transform_2(%arg0: i32) -> (i32, i32) {
    %c0_i32 = arith.constant 0 : i32
    %c0_i32_0 = arith.constant 0 : i32
    %c0_i32_1 = arith.constant 0 : i32
    return %c0_i32, %c0_i32_0 : i32, i32
  }
  func.func @transform_3(%arg0: i32) -> (i32, i32) {
    %c0_i32 = arith.constant 0 : i32
    %c0_i32_0 = arith.constant 0 : i32
    return %arg0, %c0_i32 : i32, i32
  }
}

</mosaic_0001>

<llo_original>
// kernel: tpu_custom_call.1
$region0: #{tpu_custom_call.1}
  #allocation0 [shape = 'u32[]', space=smem, size = 0x4, offset = 0x4, fixed_abs, tag = 'smem constant byte address 0x4 - core index']
  #allocation1 [shape = 'u32[72,128]{1,0:T(1,128)}', space=vmem, size = 0x9000, scoped, tag = 'internal scratch']
  %s0 = inlined_call_operand.hbm [shape: f32[16,32], index: 0, kind: input, shape index: {}]
  %s1 = inlined_call_operand.hbm [shape: f32[1,32], index: 1, kind: input, shape index: {}]
  %s2 = inlined_call_operand.vmem [shape: f32[1,32], index: 2, kind: input, shape index: {}]
  %s3 = inlined_call_operand.hbm [shape: f32[16,32], index: 3, kind: output, shape index: {}]
  %s4 = sld [smem:[#allocation0]]
  $region30: #{tpu_custom_call.1} parent=0
    _
  %s6 = ssub.s32 1, %s4
  %s7 = scalar_select 0, %s6, %s4
  $region1: #{tpu_custom_call.1} parent=0
    #allocation2 [shape = 'u8[8192]{0}', space=vmem, size = 0x2000, scoped, tag = 'input window, operand 0, single buffered']
    #allocation3 [shape = 's32[1]{0}', space=sflag, size = 0x4, scoped, tag = 'scoped memory for tpu_custom_call.1']
    #allocation4 [shape = 's32[1]{0}', space=sflag, size = 0x4, scoped, tag = 'scoped memory for tpu_custom_call.1']
    #allocation5 [shape = 'u8[512]{0}', space=vmem, size = 0x400, scoped, tag = 'input window, operand 1, single buffered']
    #allocation6 [shape = 's32[1]{0}', space=sflag, size = 0x4, scoped, tag = 'scoped memory for tpu_custom_call.1']
    #allocation7 [shape = 'u8[8192]{0}', space=vmem, size = 0x2000, scoped, tag = 'output window, operand 0, single buffered']
    %8 = vsyncpa [#allocation3], 0
    %9 = vsyncpa [#allocation6], 0
    %10 = vsyncpa [#allocation4], 0
    // Predicated region
    $region2: #{tpu_custom_call.1} parent=1 // pred_check
      _
    $region3: #{tpu_custom_call.1} parent=1 // pred_check_branch
      %12 = sbr.rel (0) target = $region5
    $region4: #{tpu_custom_call.1} parent=1 // pred_region
      %14 = vsyncadd [#allocation3], 0
      %s15 = sshll.u32 %s0, 4
      %s16 = int_to_ptr.hbm [resolvable:$true] %s15
      %s17 = sshll.u32 [#allocation2], 4
      %s18 = int_to_ptr.vmem [resolvable:$true] %s17
      %23 = dma.hbm_to_vmem [thread:$0]  %s16, 256, %s18, [#allocation3], 128, 128, 8
    $region5: #{tpu_custom_call.1} parent=1 // pred_fallthru
      _
    // Predicated region
    $region6: #{tpu_custom_call.1} parent=1 // pred_check
      _
    $region7: #{tpu_custom_call.1} parent=1 // pred_check_branch
      %25 = sbr.rel (0) target = $region9
    $region8: #{tpu_custom_call.1} parent=1 // pred_region
      %27 = vsyncadd [#allocation6], 0
      %s29 = sshll.u32 %s1, 4
      %s30 = int_to_ptr.hbm [resolvable:$true] %s29
      %s31 = sshll.u32 [#allocation5], 4
      %s32 = int_to_ptr.vmem [resolvable:$true] %s31
      %34 = dma.hbm_to_vmem [thread:$0]  %s30, 16, %s32, [#allocation6]
    $region9: #{tpu_custom_call.1} parent=1 // pred_fallthru
      _
    // Predicated region
    $region10: #{tpu_custom_call.1} parent=1 // pred_check
      _
    $region11: #{tpu_custom_call.1} parent=1 // pred_check_branch
      %36 = sbr.rel (0) target = $region13
    $region12: #{tpu_custom_call.1} parent=1 // pred_region
      _
    $region13: #{tpu_custom_call.1} parent=1 // pred_fallthru
      _
    // Predicated region
    $region14: #{tpu_custom_call.1} parent=1 // pred_check
      _
    $region15: #{tpu_custom_call.1} parent=1 // pred_check_branch
      %38 = sbr.rel (0) target = $region17
    $region16: #{tpu_custom_call.1} parent=1 // pred_region
      %40 = dma.done [#allocation3], 256
    $region17: #{tpu_custom_call.1} parent=1 // pred_fallthru
      _
    // Predicated region
    $region18: #{tpu_custom_call.1} parent=1 // pred_check
      _
    $region19: #{tpu_custom_call.1} parent=1 // pred_check_branch
      %42 = sbr.rel (0) target = $region21
    $region20: #{tpu_custom_call.1} parent=1 // pred_region
      %44 = dma.done [#allocation6], 16
    $region21: #{tpu_custom_call.1} parent=1 // pred_fallthru
      _
    %v45 = vld [vmem:[#allocation2] sm:$0xff]
    %v46 = vld [vmem:[#allocation2 + $0x8] sm:$0xff]
    %vm47 = vcmask 261120
    %v48 = vsel %vm47, %v45, 0.0
    %49 = vadd.xlane.f32.xlu0 %v48
    %v50 = vpop.xlane.xlu0 %49
    %v51 = vsel %vm47, %v46, 0.0
    %52 = vadd.xlane.f32.xlu0 %v51
    %v53 = vpop.xlane.xlu0 %52
    %v54 = vrcp.pop 32.0
    %v55 = vmul.f32 32.0, %v54
    %v56 = vsub.f32 1.0, %v55
    %v57 = vmul.f32 %v54, %v56
    %v58 = vadd.f32 %v54, %v57
    %vm59 = vweird.f32 %v54
    %v60 = vsel %vm59, %v54, %v58
    %v61 = vmul.f32 %v50, %v60
    %v62 = vmul.f32 %v53, %v60
    %v63 = vsub.f32 %v45, %v61
    %v64 = vsub.f32 %v46, %v62
    %v65 = vmul.f32 %v63, %v63
    %v66 = vmul.f32 %v64, %v64
    %v67 = vsel %vm47, %v65, 0.0
    %68 = vadd.xlane.f32.xlu0 %v67
    %v69 = vpop.xlane.xlu0 %68
    %v70 = vsel %vm47, %v66, 0.0
    %71 = vadd.xlane.f32.xlu0 %v70
    %v72 = vpop.xlane.xlu0 %71
    %v73 = vmul.f32 %v69, %v60
    %v74 = vmul.f32 %v72, %v60
    %v75 = vadd.f32 %v73, 1e-05
    %v76 = vadd.f32 %v74, 1e-05
    %v77 = vrsqrt.pop %v75
    %v78 = vmul.f32 %v77, %v75
    %v79 = vmul.f32 %v78, %v77
    %v80 = vmul.f32 0.5, %v79
    %v81 = vsub.f32 1.5, %v80
    %v82 = vmul.f32 %v77, %v81
    %vm83 = vweird.f32 %v75
    %vm84 = vweird.f32 %v77
    %vm85 = vmor %vm83, %vm84
    %v86 = vsel %vm85, %v77, %v82
    %v87 = vrsqrt.pop %v76
    %v88 = vmul.f32 %v87, %v76
    %v89 = vmul.f32 %v88, %v87
    %v90 = vmul.f32 0.5, %v89
    %v91 = vsub.f32 1.5, %v90
    %v92 = vmul.f32 %v87, %v91
    %vm93 = vweird.f32 %v76
    %vm94 = vweird.f32 %v87
    %vm95 = vmor %vm93, %vm94
    %v96 = vsel %vm95, %v87, %v92
    %v97 = vmul.f32 %v63, %v86
    %v98 = vmul.f32 %v64, %v96
    %v99 = vld [vmem:[#allocation5] sm:$0x1]
    %v101 = vperm.slane %v99, 0
    %v103 = vmul.f32 %v97, %v101
    %v104 = vmul.f32 %v98, %v101
    %v105 = vld [vmem:[%s2] sm:$0x1]
    %v107 = vperm.slane %v105, 0
    %v109 = vadd.f32 %v103, %v107
    %v110 = vadd.f32 %v104, %v107
    %111 = vst.msk [vmem:[#allocation7] sm:$0xff] %vm47, %v109
    %112 = vst.msk [vmem:[#allocation7 + $0x8] sm:$0xff] %vm47, %v110
    // Predicated region
    $region22: #{tpu_custom_call.1} parent=1 // pred_check
      _
    $region23: #{tpu_custom_call.1} parent=1 // pred_check_branch
      %114 = sbr.rel (0) target = $region25
    $region24: #{tpu_custom_call.1} parent=1 // pred_region
      %116 = vsyncadd [#allocation4], 0
      %s117 = sshll.u32 [#allocation7], 4
      %s118 = int_to_ptr.vmem [resolvable:$true] %s117
      %s119 = sshll.u32 %s3, 4
      %s120 = int_to_ptr.hbm [resolvable:$true] %s119
      %125 = dma.vmem_to_hbm [thread:$0]  %s118, 256, %s120, [#allocation4], 128, 128, 8
    $region25: #{tpu_custom_call.1} parent=1 // pred_fallthru
      _
    // Predicated region
    $region26: #{tpu_custom_call.1} parent=1 // pred_check
      _
    $region27: #{tpu_custom_call.1} parent=1 // pred_check_branch
      %127 = sbr.rel (0) target = $region29
    $region28: #{tpu_custom_call.1} parent=1 // pred_region
      %129 = dma.done [#allocation4], 256
    $region29: #{tpu_custom_call.1} parent=1 // pred_fallthru
      _
    %130 = vsyncpa [#allocation3], 1
    %131 = vsyncpa [#allocation6], 1
    %132 = vsyncpa [#allocation4], 1

</llo_original>
